<compile_context>
chip_gen: v5e
topology: v5e:2x2
jax: 0.10.0
libtpu: 0.0.40
codegen_flags: <defaults>
</compile_context>

<pallas_src>
import functools
import math

import jax
import jax.numpy as jnp
from jax.experimental import pallas as pl
from jax.experimental.pallas import tpu as pltpu


_SQRT_HALF = 1.0 / math.sqrt(2.0)


def _erf_f32(x):
    # Abramowitz & Stegun 7.1.26: |absolute error| <= 1.5e-7 (~f32 eps).
    a1, a2, a3, a4, a5 = (0.254829592, -0.284496736, 1.421413741,
                          -1.453152027, 1.061405429)
    p = 0.3275911
    sign = jnp.where(x >= 0.0, 1.0, -1.0)
    ax = jnp.abs(x)
    t = 1.0 / (1.0 + p * ax)
    poly = ((((a5 * t + a4) * t + a3) * t + a2) * t + a1) * t
    return sign * (1.0 - poly * jnp.exp(-ax * ax))


def _gelu_exact(x):
    # Matches torch.nn.GELU() (approximate='none') to within f32 precision.
    return 0.5 * x * (1.0 + _erf_f32(x * _SQRT_HALF))


# ----------------------------------------------------------------------------
# Fused MLP kernel: y = GELU(x @ w1 + b1) @ w2 + b2
# ----------------------------------------------------------------------------
def _mlp_kernel(x_ref, w1_ref, b1_ref, w2_ref, b2_ref, o_ref):
    x = x_ref[...].astype(jnp.float32)
    h = jnp.dot(x, w1_ref[...], preferred_element_type=jnp.float32) + b1_ref[...]
    h = _gelu_exact(h)
    # TODO(synk): dropout (p) is identity (p=0.0 default / eval-mode semantics).
    y = jnp.dot(h, w2_ref[...], preferred_element_type=jnp.float32) + b2_ref[...]
    o_ref[...] = y.astype(o_ref.dtype)


def mlp_forward(x, params, *, row_block=128):
    """x: (..., in_features) -> (..., out_features). One fused pallas_call."""
    w1, b1 = params["w1"], params["b1"]
    w2, b2 = params["w2"], params["b2"]
    in_features, hidden = w1.shape
    out_features = w2.shape[1]

    lead = x.shape[:-1]
    M = 1
    for d in lead:
        M *= d
    x2 = x.reshape(M, in_features)
    b1r = b1.reshape(1, hidden)
    b2r = b2.reshape(1, out_features)

    # Row-tile only when the flattened batch is big; otherwise a single grid step.
    tm = row_block if (M > row_block and M % row_block == 0) else M
    grid = (M // tm,)

    out = pl.pallas_call(
        _mlp_kernel,
        out_shape=jax.ShapeDtypeStruct((M, out_features), x.dtype),
        grid_spec=pltpu.PrefetchScalarGridSpec(
            num_scalar_prefetch=0,
            grid=grid,
            in_specs=[
                pl.BlockSpec((tm, in_features), lambda i: (i, 0)),
                pl.BlockSpec((in_features, hidden), lambda i: (0, 0)),
                pl.BlockSpec((1, hidden), lambda i: (0, 0)),
                pl.BlockSpec((hidden, out_features), lambda i: (0, 0)),
                pl.BlockSpec((1, out_features), lambda i: (0, 0)),
            ],
            out_specs=pl.BlockSpec((tm, out_features), lambda i: (i, 0)),
        ),
        compiler_params=pltpu.CompilerParams(
            dimension_semantics=("parallel",)),
    )(x2, w1, b1r, w2, b2r)
    return out.reshape(*lead, out_features)


# ----------------------------------------------------------------------------
# Deterministic parameter init (shapes follow MLP.__init__)
# ----------------------------------------------------------------------------
def init_params(key, in_features, hidden_feature, out_features):
    k1, k2, k3, k4 = jax.random.split(key, 4)
    w1 = (jax.random.normal(k1, (in_features, hidden_feature), jnp.float32)
          / jnp.sqrt(float(in_features)))
    b1 = 0.01 * jax.random.normal(k2, (hidden_feature,), jnp.float32)
    w2 = (jax.random.normal(k3, (hidden_feature, out_features), jnp.float32)
          / jnp.sqrt(float(hidden_feature)))
    b2 = 0.01 * jax.random.normal(k4, (out_features,), jnp.float32)
    return dict(w1=w1, b1=b1, w2=w2, b2=b2)


if __name__ == "__main__":
    key = jax.random.PRNGKey(0)
    kx, kp = jax.random.split(key)

    # Small, module-consistent shapes: token slab (B, T, in_features).
    B, T = 2, 8
    in_features, hidden_feature, out_features = 32, 128, 32

    x = jax.random.normal(kx, (B, T, in_features), jnp.float32)
    params = init_params(kp, in_features, hidden_feature, out_features)

    fwd = jax.jit(mlp_forward)
    y = fwd(x, params)
    jax.block_until_ready(y)

    # Pure-JAX reference (exact-erf GELU, highest-precision f32 matmuls).
    def ref(x, p):
        h = jnp.dot(x, p["w1"], precision=jax.lax.Precision.HIGHEST) + p["b1"]
        h = 0.5 * h * (1.0 + jax.scipy.special.erf(h * _SQRT_HALF))
        return jnp.dot(h, p["w2"], precision=jax.lax.Precision.HIGHEST) + p["b2"]

    y_ref = ref(x, params)

    assert y.shape == (B, T, out_features), y.shape
    assert y.dtype == jnp.float32
    assert bool(jnp.all(jnp.isfinite(y)))
    assert bool(jnp.allclose(y, y_ref, rtol=5e-3, atol=5e-3)), float(
        jnp.max(jnp.abs(y - y_ref)))
    print("KERNEL_OK")
</pallas_src>

<mosaic_0001>
module attributes {stable_mosaic.version = 11 : i64} {
  func.func @_mlp_kernel(%arg0: i32, %arg1: memref<16x32xf32, #tpu.memory_space<vmem>>, %arg2: memref<32x128xf32, #tpu.memory_space<vmem>>, %arg3: memref<1x128xf32, #tpu.memory_space<vmem>>, %arg4: memref<128x32xf32, #tpu.memory_space<vmem>>, %arg5: memref<1x32xf32, #tpu.memory_space<vmem>>, %arg6: memref<16x32xf32, #tpu.memory_space<vmem>>) attributes {dimension_semantics = [#tpu.dimension_semantics<parallel>], iteration_bounds = array<i64: 1>, scalar_prefetch = 0 : i64, scratch_operands = 0 : i64, tpu.core_type = #tpu.core_type<tc>, window_params = [{transform_indices = @transform_0, window_bounds = array<i64: 16, 32>}, {pipeline_mode = #tpu.pipeline_mode<synchronous>, transform_indices = @transform_1, window_bounds = array<i64: 32, 128>}, {pipeline_mode = #tpu.pipeline_mode<synchronous>, transform_indices = @transform_2, window_bounds = array<i64: 1, 128>}, {pipeline_mode = #tpu.pipeline_mode<synchronous>, transform_indices = @transform_3, window_bounds = array<i64: 128, 32>}, {pipeline_mode = #tpu.pipeline_mode<synchronous>, transform_indices = @transform_4, window_bounds = array<i64: 1, 32>}, {transform_indices = @transform_5, window_bounds = array<i64: 16, 32>}]} {
    %c0 = arith.constant 0 : index
    %c0_0 = arith.constant 0 : index
    %0 = vector.load %arg1[%c0, %c0_0] : memref<16x32xf32, #tpu.memory_space<vmem>>, vector<16x32xf32>
    %c0_1 = arith.constant 0 : index
    %c0_2 = arith.constant 0 : index
    %1 = vector.load %arg2[%c0_1, %c0_2] : memref<32x128xf32, #tpu.memory_space<vmem>>, vector<32x128xf32>
    %cst = arith.constant dense<0.000000e+00> : vector<16x128xf32>
    %2 = tpu.matmul %0, %1, %cst {dimension_numbers = #tpu.dot_dimension_numbers<[1], [0], [0], [1], [0, 0, 1, 1], [], []>} : vector<16x32xf32>, vector<32x128xf32>, vector<16x128xf32> -> vector<16x128xf32>
    %c0_3 = arith.constant 0 : index
    %c0_4 = arith.constant 0 : index
    %3 = vector.load %arg3[%c0_3, %c0_4] : memref<1x128xf32, #tpu.memory_space<vmem>>, vector<1x128xf32>
    %4 = vector.broadcast %3 : vector<1x128xf32> to vector<16x128xf32>
    %5 = arith.addf %2, %4 : vector<16x128xf32>
    %cst_5 = arith.constant 5.000000e-01 : f32
    %6 = vector.broadcast %cst_5 : f32 to vector<16x128xf32>
    %7 = arith.mulf %6, %5 : vector<16x128xf32>
    %cst_6 = arith.constant 0.707106769 : f32
    %8 = vector.broadcast %cst_6 : f32 to vector<16x128xf32>
    %9 = arith.mulf %5, %8 : vector<16x128xf32>
    %cst_7 = arith.constant 0.000000e+00 : f32
    %10 = vector.broadcast %cst_7 : f32 to vector<16x128xf32>
    %11 = arith.cmpf oge, %9, %10 : vector<16x128xf32>
    %cst_8 = arith.constant 1.000000e+00 : f32
    %cst_9 = arith.constant -1.000000e+00 : f32
    %12 = vector.broadcast %cst_8 : f32 to vector<16x128xf32>
    %13 = vector.broadcast %cst_9 : f32 to vector<16x128xf32>
    %14 = arith.select %11, %12, %13 : vector<16x128xi1>, vector<16x128xf32>
    %15 = math.absf %9 : vector<16x128xf32>
    %cst_10 = arith.constant 0.327591091 : f32
    %16 = vector.broadcast %cst_10 : f32 to vector<16x128xf32>
    %17 = arith.mulf %16, %15 : vector<16x128xf32>
    %cst_11 = arith.constant 1.000000e+00 : f32
    %18 = vector.broadcast %cst_11 : f32 to vector<16x128xf32>
    %19 = arith.addf %18, %17 : vector<16x128xf32>
    %cst_12 = arith.constant 1.000000e+00 : f32
    %20 = vector.broadcast %cst_12 : f32 to vector<16x128xf32>
    %21 = arith.divf %20, %19 : vector<16x128xf32>
    %cst_13 = arith.constant 1.06140542 : f32
    %22 = vector.broadcast %cst_13 : f32 to vector<16x128xf32>
    %23 = arith.mulf %22, %21 : vector<16x128xf32>
    %cst_14 = arith.constant -1.45315206 : f32
    %24 = vector.broadcast %cst_14 : f32 to vector<16x128xf32>
    %25 = arith.addf %23, %24 : vector<16x128xf32>
    %26 = arith.mulf %25, %21 : vector<16x128xf32>
    %cst_15 = arith.constant 1.42141378 : f32
    %27 = vector.broadcast %cst_15 : f32 to vector<16x128xf32>
    %28 = arith.addf %26, %27 : vector<16x128xf32>
    %29 = arith.mulf %28, %21 : vector<16x128xf32>
    %cst_16 = arith.constant -0.284496725 : f32
    %30 = vector.broadcast %cst_16 : f32 to vector<16x128xf32>
    %31 = arith.addf %29, %30 : vector<16x128xf32>
    %32 = arith.mulf %31, %21 : vector<16x128xf32>
    %cst_17 = arith.constant 0.254829586 : f32
    %33 = vector.broadcast %cst_17 : f32 to vector<16x128xf32>
    %34 = arith.addf %32, %33 : vector<16x128xf32>
    %35 = arith.mulf %34, %21 : vector<16x128xf32>
    %cst_18 = arith.constant 0.000000e+00 : f32
    %36 = vector.broadcast %cst_18 : f32 to vector<16x128xf32>
    %37 = arith.subf %36, %15 : vector<16x128xf32>
    %38 = arith.mulf %37, %15 : vector<16x128xf32>
    %39 = math.exp %38 : vector<16x128xf32>
    %40 = arith.mulf %35, %39 : vector<16x128xf32>
    %cst_19 = arith.constant 1.000000e+00 : f32
    %41 = vector.broadcast %cst_19 : f32 to vector<16x128xf32>
    %42 = arith.subf %41, %40 : vector<16x128xf32>
    %43 = arith.mulf %14, %42 : vector<16x128xf32>
    %cst_20 = arith.constant 1.000000e+00 : f32
    %44 = vector.broadcast %cst_20 : f32 to vector<16x128xf32>
    %45 = arith.addf %44, %43 : vector<16x128xf32>
    %46 = arith.mulf %7, %45 : vector<16x128xf32>
    %c0_21 = arith.constant 0 : index
    %c0_22 = arith.constant 0 : index
    %47 = vector.load %arg4[%c0_21, %c0_22] : memref<128x32xf32, #tpu.memory_space<vmem>>, vector<128x32xf32>
    %cst_23 = arith.constant dense<0.000000e+00> : vector<16x32xf32>
    %48 = tpu.matmul %46, %47, %cst_23 {dimension_numbers = #tpu.dot_dimension_numbers<[1], [0], [0], [1], [0, 0, 1, 1], [], []>} : vector<16x128xf32>, vector<128x32xf32>, vector<16x32xf32> -> vector<16x32xf32>
    %c0_24 = arith.constant 0 : index
    %c0_25 = arith.constant 0 : index
    %49 = vector.load %arg5[%c0_24, %c0_25] : memref<1x32xf32, #tpu.memory_space<vmem>>, vector<1x32xf32>
    %50 = vector.broadcast %49 : vector<1x32xf32> to vector<16x32xf32>
    %51 = arith.addf %48, %50 : vector<16x32xf32>
    %c0_26 = arith.constant 0 : index
    %c0_27 = arith.constant 0 : index
    %52 = vector.load %arg6[%c0_26, %c0_27] : memref<16x32xf32, #tpu.memory_space<vmem>>, vector<16x32xf32>
    tpu.vector_store %arg6[%c0_26, %c0_27], %51 {strides = array<i32>} : memref<16x32xf32, #tpu.memory_space<vmem>>, vector<16x32xf32>,
    return
  }
  func.func @transform_0(%arg0: i32) -> (i32, i32) {
    %c0_i32 = arith.constant 0 : i32
    %c0_i32_0 = arith.constant 0 : i32
    return %arg0, %c0_i32 : i32, i32
  }
  func.func @transform_1(%arg0: i32) -> (i32, i32) {
    %c0_i32 = arith.constant 0 : i32
    %c0_i32_0 = arith.constant 0 : i32
    %c0_i32_1 = arith.constant 0 : i32
    return %c0_i32, %c0_i32_0 : i32, i32
  }
  func.func @transform_2(%arg0: i32) -> (i32, i32) {
    %c0_i32 = arith.constant 0 : i32
    %c0_i32_0 = arith.constant 0 : i32
    %c0_i32_1 = arith.constant 0 : i32
    return %c0_i32, %c0_i32_0 : i32, i32
  }
  func.func @transform_3(%arg0: i32) -> (i32, i32) {
    %c0_i32 = arith.constant 0 : i32
    %c0_i32_0 = arith.constant 0 : i32
    %c0_i32_1 = arith.constant 0 : i32
    return %c0_i32, %c0_i32_0 : i32, i32
  }
  func.func @transform_4(%arg0: i32) -> (i32, i32) {
    %c0_i32 = arith.constant 0 : i32
    %c0_i32_0 = arith.constant 0 : i32
    %c0_i32_1 = arith.constant 0 : i32
    return %c0_i32, %c0_i32_0 : i32, i32
  }
  func.func @transform_5(%arg0: i32) -> (i32, i32) {
    %c0_i32 = arith.constant 0 : i32
    %c0_i32_0 = arith.constant 0 : i32
    return %arg0, %c0_i32 : i32, i32
  }
}

</mosaic_0001>

<llo_original>
// kernel: mlp_forward.1
$region0: #{mlp_forward.1}
  #allocation0 [shape = 'u32[]', space=smem, size = 0x4, offset = 0x4, fixed_abs, tag = 'smem constant byte address 0x4 - core index']
  #allocation1 [shape = 'u32[72,128]{1,0:T(1,128)}', space=vmem, size = 0x9000, scoped, tag = 'internal scratch']
  %s0 = inlined_call_operand.vmem [shape: f32[16,32], index: 0, kind: input, shape index: {}]
  %s1 = inlined_call_operand.vmem [shape: f32[32,128], index: 1, kind: input, shape index: {}]
  %s2 = inlined_call_operand.vmem [shape: f32[1,128], index: 2, kind: input, shape index: {}]
  %s3 = inlined_call_operand.vmem [shape: f32[128,32], index: 3, kind: input, shape index: {}]
  %s4 = inlined_call_operand.vmem [shape: f32[1,32], index: 4, kind: input, shape index: {}]
  %s5 = inlined_call_operand.hbm [shape: f32[16,32], index: 5, kind: output, shape index: {}]
  %s6 = sld [smem:[#allocation0]]
  $region30: #{mlp_forward.1} parent=0
    _
  %s8 = ssub.s32 1, %s6
  %s9 = scalar_select 0, %s8, %s6
  $region1: #{mlp_forward.1} parent=0
    #allocation2 [shape = 'u8[8192]{0}', space=vmem, size = 0x2000, scoped, tag = 'output window, operand 0, single buffered']
    #allocation3 [shape = 's32[1]{0}', space=sflag, size = 0x4, scoped, tag = 'scoped memory for mlp_forward.1']
    %10 = vsyncpa [#allocation3], 0
    // Predicated region
    $region2: #{mlp_forward.1} parent=1 // pred_check
      _
    $region3: #{mlp_forward.1} parent=1 // pred_check_branch
      %12 = sbr.rel (0) target = $region5
    $region4: #{mlp_forward.1} parent=1 // pred_region
      _
    $region5: #{mlp_forward.1} parent=1 // pred_fallthru
      _
    // Predicated region
    $region6: #{mlp_forward.1} parent=1 // pred_check
      _
    $region7: #{mlp_forward.1} parent=1 // pred_check_branch
      %14 = sbr.rel (0) target = $region9
    $region8: #{mlp_forward.1} parent=1 // pred_region
      _
    $region9: #{mlp_forward.1} parent=1 // pred_fallthru
      _
    // Predicated region
    $region10: #{mlp_forward.1} parent=1 // pred_check
      _
    $region11: #{mlp_forward.1} parent=1 // pred_check_branch
      %16 = sbr.rel (0) target = $region13
    $region12: #{mlp_forward.1} parent=1 // pred_region
      _
    $region13: #{mlp_forward.1} parent=1 // pred_fallthru
      _
    // Predicated region
    $region14: #{mlp_forward.1} parent=1 // pred_check
      _
    $region15: #{mlp_forward.1} parent=1 // pred_check_branch
      %18 = sbr.rel (0) target = $region17
    $region16: #{mlp_forward.1} parent=1 // pred_region
      _
    $region17: #{mlp_forward.1} parent=1 // pred_fallthru
      _
    // Predicated region
    $region18: #{mlp_forward.1} parent=1 // pred_check
      _
    $region19: #{mlp_forward.1} parent=1 // pred_check_branch
      %20 = sbr.rel (0) target = $region21
    $region20: #{mlp_forward.1} parent=1 // pred_region
      _
    $region21: #{mlp_forward.1} parent=1 // pred_fallthru
      _
    %v21 = vld [vmem:[%s0] sm:$0xff]
    %v22 = vld [vmem:[%s0 + $0x8] sm:$0xff]
    %v23 = vld [vmem:[%s1] sm:$0xff]
    %v24 = vld [vmem:[%s1 + $0x8] sm:$0xff]
    %v25 = vld [vmem:[%s1 + $0x10] sm:$0xff]
    %v26 = vld [vmem:[%s1 + $0x18] sm:$0xff]
    %v27 = vld [vmem:[%s2] sm:$0x1]
    %v29 = vperm.slane %v27, 0
    %vm31 = vcmask 261120
    %v33 = vsel %vm31, %v21, 0
    %v36 = vsel %vm31, %v22, 0
    %38 = vmatpush.msra.mxu0 0.0
    %39 = vmatpush.msra.mxu0 0.0
    %40 = vmatpush.msra.mxu0 0.0
    %41 = vmatpush.msra.mxu0 0.0
    %42 = vmatpush.msra.mxu0 0.0
    %43 = vmatpush.msra.mxu0 0.0
    %44 = vmatpush.msra.mxu0 0.0
    %45 = vmatpush.msra.mxu0 0.0
    %46 = vmatpush.msra.mxu0 0.0
    %47 = vmatpush.msra.mxu0 0.0
    %48 = vmatpush.msra.mxu0 0.0
    %49 = vmatpush.msra.mxu0 0.0
    %50 = vmatpush.msra.mxu0 %v26
    %51 = vmatpush.msra.mxu0 %v25
    %52 = vmatpush.msra.mxu0 %v24
    %53 = vmatpush.msra.mxu0 %v23
    %54 = vmatmul.f32.gmra.mxu0 %v33
    %v55 = vpop.f32.mrf.mxu0
    %v56 = vadd.f32 %v29, %v55
    %57 = vmatmul.f32.gmra.mxu0 %v36
    %v58 = vpop.f32.mrf.mxu0
    %v59 = vadd.f32 %v29, %v58
    %60 = vdwg.mxu0
    %v61 = vmul.f32 %v56, 0.5
    %v62 = vmul.f32 %v59, 0.5
    %v63 = vmul.f32 %v56, 0.70710677
    %v64 = vmul.f32 %v59, 0.70710677
    %vm65 = vcmp.ge.f32.partialorder %v63, 0.0
    %vm66 = vcmp.ge.f32.partialorder %v64, 0.0
    %v67 = vsel %vm65, 1.0, -1.0
    %v68 = vsel %vm66, 1.0, -1.0
    %v69 = vand.u32 2147483647, %v63
    %v70 = vand.u32 2147483647, %v64
    %v71 = vmul.f32 %v69, 0.3275911
    %v72 = vmul.f32 %v70, 0.3275911
    %v73 = vadd.f32 %v71, 1.0
    %v74 = vadd.f32 %v72, 1.0
    %v75 = vrcp.pop %v73
    %v76 = vmul.f32 %v73, %v75
    %v77 = vsub.f32 1.0, %v76
    %v78 = vmul.f32 %v75, %v77
    %v79 = vadd.f32 %v75, %v78
    %vm80 = vweird.f32 %v73
    %vm81 = vweird.f32 %v75
    %vm82 = vmor %vm80, %vm81
    %v83 = vsel %vm82, %v75, %v79
    %v84 = vand.u32 2147483647, %v73
    %vm85 = vcmp.eq.f32.partialorder %v84, 8.507059e+37
    %v86 = vand.u32 %v73, 2147483648
    %v87 = vor.u32 1.1754944e-38, %v86
    %v88 = vsel %vm85, %v87, %v83
    %v89 = vmul.f32 1.0, %v88
    %v90 = vrcp.pop %v74
    %v91 = vmul.f32 %v74, %v90
    %v92 = vsub.f32 1.0, %v91
    %v93 = vmul.f32 %v90, %v92
    %v94 = vadd.f32 %v90, %v93
    %vm95 = vweird.f32 %v74
    %vm96 = vweird.f32 %v90
    %vm97 = vmor %vm95, %vm96
    %v98 = vsel %vm97, %v90, %v94
    %v99 = vand.u32 2147483647, %v74
    %vm100 = vcmp.eq.f32.partialorder %v99, 8.507059e+37
    %v101 = vand.u32 %v74, 2147483648
    %v102 = vor.u32 1.1754944e-38, %v101
    %v103 = vsel %vm100, %v102, %v98
    %v104 = vmul.f32 1.0, %v103
    %v105 = vmul.f32 %v89, 1.0614054
    %v106 = vmul.f32 %v104, 1.0614054
    %v107 = vadd.f32 %v105, -1.4531521
    %v108 = vadd.f32 %v106, -1.4531521
    %v109 = vmul.f32 %v107, %v89
    %v110 = vmul.f32 %v108, %v104
    %v111 = vadd.f32 %v109, 1.4214138
    %v112 = vadd.f32 %v110, 1.4214138
    %v113 = vmul.f32 %v111, %v89
    %v114 = vmul.f32 %v112, %v104
    %v115 = vadd.f32 %v113, -0.28449672
    %v116 = vadd.f32 %v114, -0.28449672
    %v117 = vmul.f32 %v115, %v89
    %v118 = vmul.f32 %v116, %v104
    %v119 = vadd.f32 %v117, 0.2548296
    %v120 = vadd.f32 %v118, 0.2548296
    %v121 = vmul.f32 %v119, %v89
    %v122 = vmul.f32 %v120, %v104
    %v123 = vsub.f32 0.0, %v69
    %v124 = vsub.f32 0.0, %v70
    %v125 = vmul.f32 %v123, %v69
    %v126 = vmul.f32 %v124, %v70
    %v127 = vmul.f32 %v125, 1.442695
    %v128 = vpow.pop %v127
    %v129 = vmul.f32 %v126, 1.442695
    %v130 = vpow.pop %v129
    %v131 = vmul.f32 %v121, %v128
    %v132 = vmul.f32 %v122, %v130
    %v133 = vsub.f32 1.0, %v131
    %v134 = vsub.f32 1.0, %v132
    %v135 = vmul.f32 %v67, %v133
    %v136 = vmul.f32 %v68, %v134
    %v137 = vadd.f32 %v135, 1.0
    %v138 = vadd.f32 %v136, 1.0
    %v139 = vmul.f32 %v61, %v137
    %v140 = vmul.f32 %v62, %v138
    %v141 = vld [vmem:[%s3] sm:$0xff]
    %v142 = vld [vmem:[%s3 + $0x8] sm:$0xff]
    %v143 = vld [vmem:[%s3 + $0x10] sm:$0xff]
    %v144 = vld [vmem:[%s3 + $0x18] sm:$0xff]
    %v145 = vld [vmem:[%s3 + $0x20] sm:$0xff]
    %v146 = vld [vmem:[%s3 + $0x28] sm:$0xff]
    %v147 = vld [vmem:[%s3 + $0x30] sm:$0xff]
    %v148 = vld [vmem:[%s3 + $0x38] sm:$0xff]
    %v149 = vld [vmem:[%s3 + $0x40] sm:$0xff]
    %v150 = vld [vmem:[%s3 + $0x48] sm:$0xff]
    %v151 = vld [vmem:[%s3 + $0x50] sm:$0xff]
    %v152 = vld [vmem:[%s3 + $0x58] sm:$0xff]
    %v153 = vld [vmem:[%s3 + $0x60] sm:$0xff]
    %v154 = vld [vmem:[%s3 + $0x68] sm:$0xff]
    %v155 = vld [vmem:[%s3 + $0x70] sm:$0xff]
    %v156 = vld [vmem:[%s3 + $0x78] sm:$0xff]
    %v157 = vld [vmem:[%s4] sm:$0x1]
    %v159 = vperm.slane %v157, 0
    %161 = vmatpush.msra.mxu0 %v156
    %162 = vmatpush.msra.mxu0 %v155
    %163 = vmatpush.msra.mxu0 %v154
    %164 = vmatpush.msra.mxu0 %v153
    %165 = vmatpush.msra.mxu0 %v152
    %166 = vmatpush.msra.mxu0 %v151
    %167 = vmatpush.msra.mxu0 %v150
    %168 = vmatpush.msra.mxu0 %v149
    %169 = vmatpush.msra.mxu0 %v148
    %170 = vmatpush.msra.mxu0 %v147
    %171 = vmatpush.msra.mxu0 %v146
    %172 = vmatpush.msra.mxu0 %v145
    %173 = vmatpush.msra.mxu0 %v144
    %174 = vmatpush.msra.mxu0 %v143
    %175 = vmatpush.msra.mxu0 %v142
    %176 = vmatpush.msra.mxu0 %v141
    %177 = vmatmul.f32.gmra.mxu0 %v139
    %v178 = vpop.f32.mrf.mxu0
    %v179 = vadd.f32 %v159, %v178
    %180 = vmatmul.f32.gmra.mxu0 %v140
    %v181 = vpop.f32.mrf.mxu0
    %v182 = vadd.f32 %v159, %v181
    %183 = vdwg.mxu0
    %184 = vst.msk [vmem:[#allocation2] sm:$0xff] %vm31, %v179
    %185 = vst.msk [vmem:[#allocation2 + $0x8] sm:$0xff] %vm31, %v182
    // Predicated region
    $region22: #{mlp_forward.1} parent=1 // pred_check
      _
    $region23: #{mlp_forward.1} parent=1 // pred_check_branch
      %187 = sbr.rel (0) target = $region25
    $region24: #{mlp_forward.1} parent=1 // pred_region
      %189 = vsyncadd [#allocation3], 0
      %s190 = sshll.u32 [#allocation2], 4
      %s191 = int_to_ptr.vmem [resolvable:$true] %s190
      %s192 = sshll.u32 %s5, 4
      %s193 = int_to_ptr.hbm [resolvable:$true] %s192
      %198 = dma.vmem_to_hbm [thread:$0]  %s191, 256, %s193, [#allocation3], 128, 128, 8
    $region25: #{mlp_forward.1} parent=1 // pred_fallthru
      _
    // Predicated region
    $region26: #{mlp_forward.1} parent=1 // pred_check
      _
    $region27: #{mlp_forward.1} parent=1 // pred_check_branch
      %200 = sbr.rel (0) target = $region29
    $region28: #{mlp_forward.1} parent=1 // pred_region
      %202 = dma.done [#allocation3], 256
    $region29: #{mlp_forward.1} parent=1 // pred_fallthru
      _
    %203 = vsyncpa [#allocation3], 1

</llo_original>
